<compile_context>
chip_gen: v5e
topology: v5e:2x2
jax: 0.10.0
libtpu: 0.0.40
codegen_flags: <defaults>
</compile_context>

<pallas_src>
import math

import jax
import jax.numpy as jnp
from jax import lax
from jax.experimental import pallas as pl
from jax.experimental.pallas import tpu as pltpu

# ---- module hyperparameters (from the PyTorch script) ----
CONTEXT_LENGTH = 16
D_MODEL = 64
NUM_HEADS = 4
HEAD_SIZE = D_MODEL // NUM_HEADS  # 16


def mha_kernel(x_ref, wqkvT_ref, wpT_ref, bp_ref, o_ref):
    # x_ref: (Bt, T, C); wqkvT_ref: (C, 3C); wpT_ref: (C, C); bp_ref: (1, C)
    # o_ref: (Bt, T, C)
    Bt, T, C = x_ref.shape
    M = Bt * T

    # One fused QKV matmul over all rows in this block.
    xf = x_ref[...].reshape(M, C)
    qkv = jnp.dot(xf, wqkvT_ref[...], preferred_element_type=jnp.float32)  # (M, 3C)

    # Causal additive bias (0 / -1e30), computed once per grid step.
    row = lax.broadcasted_iota(jnp.int32, (T, T), 0)
    col = lax.broadcasted_iota(jnp.int32, (T, T), 1)
    bias = jnp.where(row >= col, 0.0, -1e30).astype(jnp.float32)  # (T, T)

    # Fold the 1/sqrt(head_size) score scale into q once (single VPU mul).
    scale = 1.0 / math.sqrt(HEAD_SIZE)
    q_all = qkv[:, :C] * scale                                    # (M, C)

    # Static loop over heads; each head is a batched matmul over the Bt batch rows.
    # Head h's projected contribution is accumulated directly (concat folded into
    # the projection), so no VMEM concat scratch is needed.
    acc = jnp.zeros((M, C), jnp.float32)
    for h in range(NUM_HEADS):
        lo = h * HEAD_SIZE
        qh = q_all[:, lo:lo + HEAD_SIZE].reshape(Bt, T, HEAD_SIZE)
        kh = qkv[:, C + lo:C + lo + HEAD_SIZE].reshape(Bt, T, HEAD_SIZE)
        vh = qkv[:, 2 * C + lo:2 * C + lo + HEAD_SIZE].reshape(Bt, T, HEAD_SIZE)

        # Contract last dims directly (no explicit kh.T transpose).
        s = jnp.einsum("bqd,bkd->bqk", qh, kh,
                       preferred_element_type=jnp.float32)                 # (Bt, T, T)
        s = s + bias[None, :, :]
        m = jnp.max(s, axis=-1, keepdims=True)
        p = jnp.exp(s - m)
        denom = jnp.sum(p, axis=-1, keepdims=True)                         # (Bt, T, 1)
        oh = jnp.einsum("bqk,bkd->bqd", p, vh,
                        preferred_element_type=jnp.float32)                # (Bt, T, D)
        oh = oh * pl.reciprocal(denom, approx=True)                        # EUP slot

        # concat(heads) @ Wp^T  ==  sum_h head_h @ Wp^T[h*D:(h+1)*D, :]
        # (sublane-aligned static row slice of the projection weight).
        acc = acc + jnp.dot(oh.reshape(M, HEAD_SIZE),
                            wpT_ref[lo:lo + HEAD_SIZE, :],
                            preferred_element_type=jnp.float32)

    out = acc + bp_ref[...]
    o_ref[...] = out.reshape(Bt, T, C)


def _pick_block_batch(B: int, T: int, target_rows: int = 256) -> int:
    """Largest divisor of B such that Bt*T <= target_rows (at least 1)."""
    best = 1
    for d in range(1, B + 1):
        if B % d == 0 and d * T <= target_rows:
            best = d
    return best


@jax.jit
def multi_head_attention(x, wqkvT, wpT, bp):
    B, T, C = x.shape
    Bt = _pick_block_batch(B, T)   # whole batch in one step for the small test
    num_blocks = B // Bt

    flops = (2 * B * T * C * (3 * C)      # fused QKV matmul
             + 4 * B * T * T * C          # scores + weighted-sum over all heads
             + 2 * B * T * C * C)         # output projection
    transcendentals = B * NUM_HEADS * T * T           # exp
    bytes_accessed = 4 * (2 * B * T * C + 3 * C * C + C * C + C)

    return pl.pallas_call(
        mha_kernel,
        out_shape=jax.ShapeDtypeStruct((B, T, C), jnp.float32),
        grid_spec=pltpu.PrefetchScalarGridSpec(
            num_scalar_prefetch=0,
            grid=(num_blocks,),
            in_specs=[
                pl.BlockSpec((Bt, T, C), lambda b: (b, 0, 0)),   # x: Bt batch rows/step
                pl.BlockSpec((C, 3 * C), lambda b: (0, 0)),      # fused QKV W^T
                pl.BlockSpec((C, C), lambda b: (0, 0)),          # proj W^T
                pl.BlockSpec((1, C), lambda b: (0, 0)),          # proj bias
            ],
            out_specs=pl.BlockSpec((Bt, T, C), lambda b: (b, 0, 0)),
        ),
        compiler_params=pltpu.CompilerParams(dimension_semantics=("parallel",)),
        cost_estimate=pl.CostEstimate(
            flops=flops, transcendentals=transcendentals,
            bytes_accessed=bytes_accessed),
    )(x, wqkvT, wpT, bp)


def reference(x, wqT, wkT, wvT, wpT, bp):
    # Pure-JAX reference of the PyTorch forward (eval mode).
    B, T, C = x.shape
    q = x @ wqT
    k = x @ wkT
    v = x @ wvT
    q = q.reshape(B, T, NUM_HEADS, HEAD_SIZE).transpose(0, 2, 1, 3)
    k = k.reshape(B, T, NUM_HEADS, HEAD_SIZE).transpose(0, 2, 1, 3)
    v = v.reshape(B, T, NUM_HEADS, HEAD_SIZE).transpose(0, 2, 1, 3)
    s = jnp.einsum("bhqd,bhkd->bhqk", q, k) / math.sqrt(HEAD_SIZE)
    mask = jnp.tril(jnp.ones((T, T), dtype=bool))
    s = jnp.where(mask, s, -jnp.inf)
    p = jax.nn.softmax(s, axis=-1)
    o = jnp.einsum("bhqk,bhkd->bhqd", p, v)
    o = o.transpose(0, 2, 1, 3).reshape(B, T, C)
    return o @ wpT + bp[0]


if __name__ == "__main__":
    key = jax.random.PRNGKey(0)
    kx, kq, kk, kv, kp, kb = jax.random.split(key, 6)

    B, T = 2, 8  # T <= context_length
    x = jax.random.normal(kx, (B, T, D_MODEL), dtype=jnp.float32)

    # Per-head Linear weights: torch nn.Linear(d_model, head_size, bias=False)
    # has weight shape (head_size, d_model); forward is x @ W^T.
    # Stack heads so column block h of wqT equals W_h^T, matching torch.cat order.
    bound = 1.0 / math.sqrt(D_MODEL)
    wq = jax.random.uniform(kq, (NUM_HEADS, HEAD_SIZE, D_MODEL), jnp.float32, -bound, bound)
    wk = jax.random.uniform(kk, (NUM_HEADS, HEAD_SIZE, D_MODEL), jnp.float32, -bound, bound)
    wv = jax.random.uniform(kv, (NUM_HEADS, HEAD_SIZE, D_MODEL), jnp.float32, -bound, bound)
    wqT = jnp.transpose(wq, (2, 0, 1)).reshape(D_MODEL, D_MODEL)
    wkT = jnp.transpose(wk, (2, 0, 1)).reshape(D_MODEL, D_MODEL)
    wvT = jnp.transpose(wv, (2, 0, 1)).reshape(D_MODEL, D_MODEL)
    wqkvT = jnp.concatenate([wqT, wkT, wvT], axis=1)  # (C, 3C) fused QKV weight

    # proj: nn.Linear(d_model, d_model) -> weight (d_model, d_model), bias (d_model,)
    wp = jax.random.uniform(kp, (D_MODEL, D_MODEL), jnp.float32, -bound, bound)
    bp = jax.random.uniform(kb, (1, D_MODEL), jnp.float32, -bound, bound)
    wpT = wp.T

    out = multi_head_attention(x, wqkvT, wpT, bp)
    out = jax.block_until_ready(out)

    ref = reference(x, wqT, wkT, wvT, wpT, bp)
    assert out.shape == (B, T, D_MODEL)
    # Slightly looser than 1e-4 because the softmax denominator uses the EUP
    # approximate reciprocal (pl.reciprocal(approx=True)).
    assert jnp.allclose(out, ref, atol=2e-3, rtol=2e-3), "mismatch vs reference"

    print("KERNEL_OK")
</pallas_src>

<mosaic_0001>
module attributes {stable_mosaic.version = 11 : i64} {
  func.func @mha_kernel(%arg0: i32, %arg1: memref<2x8x64xf32, #tpu.memory_space<vmem>>, %arg2: memref<64x192xf32, #tpu.memory_space<vmem>>, %arg3: memref<64x64xf32, #tpu.memory_space<vmem>>, %arg4: memref<1x64xf32, #tpu.memory_space<vmem>>, %arg5: memref<2x8x64xf32, #tpu.memory_space<vmem>>) attributes {dimension_semantics = [#tpu.dimension_semantics<parallel>], iteration_bounds = array<i64: 1>, scalar_prefetch = 0 : i64, scratch_operands = 0 : i64, tpu.core_type = #tpu.core_type<tc>, window_params = [{transform_indices = @transform_0, window_bounds = array<i64: 2, 8, 64>}, {pipeline_mode = #tpu.pipeline_mode<synchronous>, transform_indices = @transform_1, window_bounds = array<i64: 64, 192>}, {pipeline_mode = #tpu.pipeline_mode<synchronous>, transform_indices = @transform_2, window_bounds = array<i64: 64, 64>}, {pipeline_mode = #tpu.pipeline_mode<synchronous>, transform_indices = @transform_3, window_bounds = array<i64: 1, 64>}, {transform_indices = @transform_4, window_bounds = array<i64: 2, 8, 64>}]} {
    %c0 = arith.constant 0 : index
    %c0_0 = arith.constant 0 : index
    %c0_1 = arith.constant 0 : index
    %0 = vector.load %arg1[%c0, %c0_0, %c0_1] : memref<2x8x64xf32, #tpu.memory_space<vmem>>, vector<2x8x64xf32>
    %1 = vector.shape_cast %0 : vector<2x8x64xf32> to vector<16x64xf32>
    %c0_2 = arith.constant 0 : index
    %c0_3 = arith.constant 0 : index
    %2 = vector.load %arg2[%c0_2, %c0_3] : memref<64x192xf32, #tpu.memory_space<vmem>>, vector<64x192xf32>
    %cst = arith.constant dense<0.000000e+00> : vector<16x192xf32>
    %3 = tpu.matmul %1, %2, %cst {dimension_numbers = #tpu.dot_dimension_numbers<[1], [0], [0], [1], [0, 0, 1, 1], [], []>} : vector<16x64xf32>, vector<64x192xf32>, vector<16x192xf32> -> vector<16x192xf32>
    %4 = tpu.iota {dimensions = array<i32: 0>} : vector<8x8xi32>
    %5 = tpu.iota {dimensions = array<i32: 1>} : vector<8x8xi32>
    %6 = arith.cmpi sge, %4, %5 : vector<8x8xi32>
    %cst_4 = arith.constant 0.000000e+00 : f32
    %cst_5 = arith.constant -1.000000e+30 : f32
    %7 = vector.broadcast %cst_4 : f32 to vector<8x8xf32>
    %8 = vector.broadcast %cst_5 : f32 to vector<8x8xf32>
    %9 = arith.select %6, %7, %8 : vector<8x8xi1>, vector<8x8xf32>
    %10 = vector.extract_strided_slice %3 {offsets = [0, 0], sizes = [16, 64], strides = [1, 1]} : vector<16x192xf32> to vector<16x64xf32>
    %cst_6 = arith.constant 2.500000e-01 : f32
    %11 = vector.broadcast %cst_6 : f32 to vector<16x64xf32>
    %12 = arith.mulf %10, %11 : vector<16x64xf32>
    %cst_7 = arith.constant 0.000000e+00 : f32
    %13 = vector.broadcast %cst_7 : f32 to vector<16x64xf32>
    %14 = vector.extract_strided_slice %12 {offsets = [0, 0], sizes = [16, 16], strides = [1, 1]} : vector<16x64xf32> to vector<16x16xf32>
    %15 = vector.shape_cast %14 : vector<16x16xf32> to vector<2x8x16xf32>
    %16 = vector.extract_strided_slice %3 {offsets = [0, 64], sizes = [16, 16], strides = [1, 1]} : vector<16x192xf32> to vector<16x16xf32>
    %17 = vector.shape_cast %16 : vector<16x16xf32> to vector<2x8x16xf32>
    %18 = vector.extract_strided_slice %3 {offsets = [0, 128], sizes = [16, 16], strides = [1, 1]} : vector<16x192xf32> to vector<16x16xf32>
    %19 = vector.shape_cast %18 : vector<16x16xf32> to vector<2x8x16xf32>
    "tpu.trace_start"() <{level = 10 : i32, message = "bqd,bkd->bqk"}> : () -> ()
    %cst_8 = arith.constant dense<0.000000e+00> : vector<2x8x8xf32>
    %20 = tpu.matmul %15, %17, %cst_8 {dimension_numbers = #tpu.dot_dimension_numbers<[2], [2], [1], [1], [0, 0, 0, 1, 1, 1], [0], [0]>} : vector<2x8x16xf32>, vector<2x8x16xf32>, vector<2x8x8xf32> -> vector<2x8x8xf32>
    "tpu.trace_stop"() : () -> ()
    %21 = vector.shape_cast %9 : vector<8x8xf32> to vector<1x8x8xf32>
    %22 = vector.broadcast %21 : vector<1x8x8xf32> to vector<2x8x8xf32>
    %23 = arith.addf %20, %22 : vector<2x8x8xf32>
    %cst_9 = arith.constant dense<0xFF800000> : vector<2x8xf32>
    %24 = vector.multi_reduction <maximumf>, %23, %cst_9 [2] : vector<2x8x8xf32> to vector<2x8xf32>
    %25 = vector.shape_cast %24 : vector<2x8xf32> to vector<2x8x1xf32>
    %26 = vector.broadcast %25 : vector<2x8x1xf32> to vector<2x8x8xf32>
    %27 = arith.subf %23, %26 : vector<2x8x8xf32>
    %28 = math.exp %27 : vector<2x8x8xf32>
    %cst_10 = arith.constant dense<0.000000e+00> : vector<2x8xf32>
    %29 = vector.multi_reduction <add>, %28, %cst_10 [2] : vector<2x8x8xf32> to vector<2x8xf32>
    %30 = vector.shape_cast %29 : vector<2x8xf32> to vector<2x8x1xf32>
    "tpu.trace_start"() <{level = 10 : i32, message = "bqk,bkd->bqd"}> : () -> ()
    %cst_11 = arith.constant dense<0.000000e+00> : vector<2x8x16xf32>
    %31 = tpu.matmul %28, %19, %cst_11 {dimension_numbers = #tpu.dot_dimension_numbers<[2], [1], [1], [2], [0, 0, 0, 1, 1, 2], [0], [0]>} : vector<2x8x8xf32>, vector<2x8x16xf32>, vector<2x8x16xf32> -> vector<2x8x16xf32>
    "tpu.trace_stop"() : () -> ()
    %32 = tpu.reciprocal %30 {approx = true} : vector<2x8x1xf32> -> vector<2x8x1xf32>
    %33 = vector.broadcast %32 : vector<2x8x1xf32> to vector<2x8x16xf32>
    %34 = arith.mulf %31, %33 : vector<2x8x16xf32>
    %35 = vector.shape_cast %34 : vector<2x8x16xf32> to vector<16x16xf32>
    %c0_12 = arith.constant 0 : index
    %c0_13 = arith.constant 0 : index
    %36 = vector.load %arg3[%c0_12, %c0_13] : memref<64x64xf32, #tpu.memory_space<vmem>>, vector<16x64xf32>
    %cst_14 = arith.constant dense<0.000000e+00> : vector<16x64xf32>
    %37 = tpu.matmul %35, %36, %cst_14 {dimension_numbers = #tpu.dot_dimension_numbers<[1], [0], [0], [1], [0, 0, 1, 1], [], []>} : vector<16x16xf32>, vector<16x64xf32>, vector<16x64xf32> -> vector<16x64xf32>
    %38 = arith.addf %13, %37 : vector<16x64xf32>
    %39 = vector.extract_strided_slice %12 {offsets = [0, 16], sizes = [16, 16], strides = [1, 1]} : vector<16x64xf32> to vector<16x16xf32>
    %40 = vector.shape_cast %39 : vector<16x16xf32> to vector<2x8x16xf32>
    %41 = vector.extract_strided_slice %3 {offsets = [0, 80], sizes = [16, 16], strides = [1, 1]} : vector<16x192xf32> to vector<16x16xf32>
    %42 = vector.shape_cast %41 : vector<16x16xf32> to vector<2x8x16xf32>
    %43 = vector.extract_strided_slice %3 {offsets = [0, 144], sizes = [16, 16], strides = [1, 1]} : vector<16x192xf32> to vector<16x16xf32>
    %44 = vector.shape_cast %43 : vector<16x16xf32> to vector<2x8x16xf32>
    "tpu.trace_start"() <{level = 10 : i32, message = "bqd,bkd->bqk"}> : () -> ()
    %cst_15 = arith.constant dense<0.000000e+00> : vector<2x8x8xf32>
    %45 = tpu.matmul %40, %42, %cst_15 {dimension_numbers = #tpu.dot_dimension_numbers<[2], [2], [1], [1], [0, 0, 0, 1, 1, 1], [0], [0]>} : vector<2x8x16xf32>, vector<2x8x16xf32>, vector<2x8x8xf32> -> vector<2x8x8xf32>
    "tpu.trace_stop"() : () -> ()
    %46 = vector.shape_cast %9 : vector<8x8xf32> to vector<1x8x8xf32>
    %47 = vector.broadcast %46 : vector<1x8x8xf32> to vector<2x8x8xf32>
    %48 = arith.addf %45, %47 : vector<2x8x8xf32>
    %cst_16 = arith.constant dense<0xFF800000> : vector<2x8xf32>
    %49 = vector.multi_reduction <maximumf>, %48, %cst_16 [2] : vector<2x8x8xf32> to vector<2x8xf32>
    %50 = vector.shape_cast %49 : vector<2x8xf32> to vector<2x8x1xf32>
    %51 = vector.broadcast %50 : vector<2x8x1xf32> to vector<2x8x8xf32>
    %52 = arith.subf %48, %51 : vector<2x8x8xf32>
    %53 = math.exp %52 : vector<2x8x8xf32>
    %cst_17 = arith.constant dense<0.000000e+00> : vector<2x8xf32>
    %54 = vector.multi_reduction <add>, %53, %cst_17 [2] : vector<2x8x8xf32> to vector<2x8xf32>
    %55 = vector.shape_cast %54 : vector<2x8xf32> to vector<2x8x1xf32>
    "tpu.trace_start"() <{level = 10 : i32, message = "bqk,bkd->bqd"}> : () -> ()
    %cst_18 = arith.constant dense<0.000000e+00> : vector<2x8x16xf32>
    %56 = tpu.matmul %53, %44, %cst_18 {dimension_numbers = #tpu.dot_dimension_numbers<[2], [1], [1], [2], [0, 0, 0, 1, 1, 2], [0], [0]>} : vector<2x8x8xf32>, vector<2x8x16xf32>, vector<2x8x16xf32> -> vector<2x8x16xf32>
    "tpu.trace_stop"() : () -> ()
    %57 = tpu.reciprocal %55 {approx = true} : vector<2x8x1xf32> -> vector<2x8x1xf32>
    %58 = vector.broadcast %57 : vector<2x8x1xf32> to vector<2x8x16xf32>
    %59 = arith.mulf %56, %58 : vector<2x8x16xf32>
    %60 = vector.shape_cast %59 : vector<2x8x16xf32> to vector<16x16xf32>
    %c16 = arith.constant 16 : index
    %c0_19 = arith.constant 0 : index
    %61 = vector.load %arg3[%c16, %c0_19] : memref<64x64xf32, #tpu.memory_space<vmem>>, vector<16x64xf32>
    %cst_20 = arith.constant dense<0.000000e+00> : vector<16x64xf32>
    %62 = tpu.matmul %60, %61, %cst_20 {dimension_numbers = #tpu.dot_dimension_numbers<[1], [0], [0], [1], [0, 0, 1, 1], [], []>} : vector<16x16xf32>, vector<16x64xf32>, vector<16x64xf32> -> vector<16x64xf32>
    %63 = arith.addf %38, %62 : vector<16x64xf32>
    %64 = vector.extract_strided_slice %12 {offsets = [0, 32], sizes = [16, 16], strides = [1, 1]} : vector<16x64xf32> to vector<16x16xf32>
    %65 = vector.shape_cast %64 : vector<16x16xf32> to vector<2x8x16xf32>
    %66 = vector.extract_strided_slice %3 {offsets = [0, 96], sizes = [16, 16], strides = [1, 1]} : vector<16x192xf32> to vector<16x16xf32>
    %67 = vector.shape_cast %66 : vector<16x16xf32> to vector<2x8x16xf32>
    %68 = vector.extract_strided_slice %3 {offsets = [0, 160], sizes = [16, 16], strides = [1, 1]} : vector<16x192xf32> to vector<16x16xf32>
    %69 = vector.shape_cast %68 : vector<16x16xf32> to vector<2x8x16xf32>
    "tpu.trace_start"() <{level = 10 : i32, message = "bqd,bkd->bqk"}> : () -> ()
    %cst_21 = arith.constant dense<0.000000e+00> : vector<2x8x8xf32>
    %70 = tpu.matmul %65, %67, %cst_21 {dimension_numbers = #tpu.dot_dimension_numbers<[2], [2], [1], [1], [0, 0, 0, 1, 1, 1], [0], [0]>} : vector<2x8x16xf32>, vector<2x8x16xf32>, vector<2x8x8xf32> -> vector<2x8x8xf32>
    "tpu.trace_stop"() : () -> ()
    %71 = vector.shape_cast %9 : vector<8x8xf32> to vector<1x8x8xf32>
    %72 = vector.broadcast %71 : vector<1x8x8xf32> to vector<2x8x8xf32>
    %73 = arith.addf %70, %72 : vector<2x8x8xf32>
    %cst_22 = arith.constant dense<0xFF800000> : vector<2x8xf32>
    %74 = vector.multi_reduction <maximumf>, %73, %cst_22 [2] : vector<2x8x8xf32> to vector<2x8xf32>
    %75 = vector.shape_cast %74 : vector<2x8xf32> to vector<2x8x1xf32>
    %76 = vector.broadcast %75 : vector<2x8x1xf32> to vector<2x8x8xf32>
    %77 = arith.subf %73, %76 : vector<2x8x8xf32>
    %78 = math.exp %77 : vector<2x8x8xf32>
    %cst_23 = arith.constant dense<0.000000e+00> : vector<2x8xf32>
    %79 = vector.multi_reduction <add>, %78, %cst_23 [2] : vector<2x8x8xf32> to vector<2x8xf32>
    %80 = vector.shape_cast %79 : vector<2x8xf32> to vector<2x8x1xf32>
    "tpu.trace_start"() <{level = 10 : i32, message = "bqk,bkd->bqd"}> : () -> ()
    %cst_24 = arith.constant dense<0.000000e+00> : vector<2x8x16xf32>
    %81 = tpu.matmul %78, %69, %cst_24 {dimension_numbers = #tpu.dot_dimension_numbers<[2], [1], [1], [2], [0, 0, 0, 1, 1, 2], [0], [0]>} : vector<2x8x8xf32>, vector<2x8x16xf32>, vector<2x8x16xf32> -> vector<2x8x16xf32>
    "tpu.trace_stop"() : () -> ()
    %82 = tpu.reciprocal %80 {approx = true} : vector<2x8x1xf32> -> vector<2x8x1xf32>
    %83 = vector.broadcast %82 : vector<2x8x1xf32> to vector<2x8x16xf32>
    %84 = arith.mulf %81, %83 : vector<2x8x16xf32>
    %85 = vector.shape_cast %84 : vector<2x8x16xf32> to vector<16x16xf32>
    %c32 = arith.constant 32 : index
    %c0_25 = arith.constant 0 : index
    %86 = vector.load %arg3[%c32, %c0_25] : memref<64x64xf32, #tpu.memory_space<vmem>>, vector<16x64xf32>
    %cst_26 = arith.constant dense<0.000000e+00> : vector<16x64xf32>
    %87 = tpu.matmul %85, %86, %cst_26 {dimension_numbers = #tpu.dot_dimension_numbers<[1], [0], [0], [1], [0, 0, 1, 1], [], []>} : vector<16x16xf32>, vector<16x64xf32>, vector<16x64xf32> -> vector<16x64xf32>
    %88 = arith.addf %63, %87 : vector<16x64xf32>
    %89 = vector.extract_strided_slice %12 {offsets = [0, 48], sizes = [16, 16], strides = [1, 1]} : vector<16x64xf32> to vector<16x16xf32>
    %90 = vector.shape_cast %89 : vector<16x16xf32> to vector<2x8x16xf32>
    %91 = vector.extract_strided_slice %3 {offsets = [0, 112], sizes = [16, 16], strides = [1, 1]} : vector<16x192xf32> to vector<16x16xf32>
    %92 = vector.shape_cast %91 : vector<16x16xf32> to vector<2x8x16xf32>
    %93 = vector.extract_strided_slice %3 {offsets = [0, 176], sizes = [16, 16], strides = [1, 1]} : vector<16x192xf32> to vector<16x16xf32>
    %94 = vector.shape_cast %93 : vector<16x16xf32> to vector<2x8x16xf32>
    "tpu.trace_start"() <{level = 10 : i32, message = "bqd,bkd->bqk"}> : () -> ()
    %cst_27 = arith.constant dense<0.000000e+00> : vector<2x8x8xf32>
    %95 = tpu.matmul %90, %92, %cst_27 {dimension_numbers = #tpu.dot_dimension_numbers<[2], [2], [1], [1], [0, 0, 0, 1, 1, 1], [0], [0]>} : vector<2x8x16xf32>, vector<2x8x16xf32>, vector<2x8x8xf32> -> vector<2x8x8xf32>
    "tpu.trace_stop"() : () -> ()
    %96 = vector.shape_cast %9 : vector<8x8xf32> to vector<1x8x8xf32>
    %97 = vector.broadcast %96 : vector<1x8x8xf32> to vector<2x8x8xf32>
    %98 = arith.addf %95, %97 : vector<2x8x8xf32>
    %cst_28 = arith.constant dense<0xFF800000> : vector<2x8xf32>
    %99 = vector.multi_reduction <maximumf>, %98, %cst_28 [2] : vector<2x8x8xf32> to vector<2x8xf32>
    %100 = vector.shape_cast %99 : vector<2x8xf32> to vector<2x8x1xf32>
    %101 = vector.broadcast %100 : vector<2x8x1xf32> to vector<2x8x8xf32>
    %102 = arith.subf %98, %101 : vector<2x8x8xf32>
    %103 = math.exp %102 : vector<2x8x8xf32>
    %cst_29 = arith.constant dense<0.000000e+00> : vector<2x8xf32>
    %104 = vector.multi_reduction <add>, %103, %cst_29 [2] : vector<2x8x8xf32> to vector<2x8xf32>
    %105 = vector.shape_cast %104 : vector<2x8xf32> to vector<2x8x1xf32>
    "tpu.trace_start"() <{level = 10 : i32, message = "bqk,bkd->bqd"}> : () -> ()
    %cst_30 = arith.constant dense<0.000000e+00> : vector<2x8x16xf32>
    %106 = tpu.matmul %103, %94, %cst_30 {dimension_numbers = #tpu.dot_dimension_numbers<[2], [1], [1], [2], [0, 0, 0, 1, 1, 2], [0], [0]>} : vector<2x8x8xf32>, vector<2x8x16xf32>, vector<2x8x16xf32> -> vector<2x8x16xf32>
    "tpu.trace_stop"() : () -> ()
    %107 = tpu.reciprocal %105 {approx = true} : vector<2x8x1xf32> -> vector<2x8x1xf32>
    %108 = vector.broadcast %107 : vector<2x8x1xf32> to vector<2x8x16xf32>
    %109 = arith.mulf %106, %108 : vector<2x8x16xf32>
    %110 = vector.shape_cast %109 : vector<2x8x16xf32> to vector<16x16xf32>
    %c48 = arith.constant 48 : index
    %c0_31 = arith.constant 0 : index
    %111 = vector.load %arg3[%c48, %c0_31] : memref<64x64xf32, #tpu.memory_space<vmem>>, vector<16x64xf32>
    %cst_32 = arith.constant dense<0.000000e+00> : vector<16x64xf32>
    %112 = tpu.matmul %110, %111, %cst_32 {dimension_numbers = #tpu.dot_dimension_numbers<[1], [0], [0], [1], [0, 0, 1, 1], [], []>} : vector<16x16xf32>, vector<16x64xf32>, vector<16x64xf32> -> vector<16x64xf32>
    %113 = arith.addf %88, %112 : vector<16x64xf32>
    %c0_33 = arith.constant 0 : index
    %c0_34 = arith.constant 0 : index
    %114 = vector.load %arg4[%c0_33, %c0_34] : memref<1x64xf32, #tpu.memory_space<vmem>>, vector<1x64xf32>
    %115 = vector.broadcast %114 : vector<1x64xf32> to vector<16x64xf32>
    %116 = arith.addf %113, %115 : vector<16x64xf32>
    %117 = vector.shape_cast %116 : vector<16x64xf32> to vector<2x8x64xf32>
    %c0_35 = arith.constant 0 : index
    %c0_36 = arith.constant 0 : index
    %c0_37 = arith.constant 0 : index
    %118 = vector.load %arg5[%c0_35, %c0_36, %c0_37] : memref<2x8x64xf32, #tpu.memory_space<vmem>>, vector<2x8x64xf32>
    tpu.vector_store %arg5[%c0_35, %c0_36, %c0_37], %117 {strides = array<i32>} : memref<2x8x64xf32, #tpu.memory_space<vmem>>, vector<2x8x64xf32>,
    return
  }
  func.func @transform_0(%arg0: i32) -> (i32, i32, i32) {
    %c0_i32 = arith.constant 0 : i32
    %c0_i32_0 = arith.constant 0 : i32
    %c0_i32_1 = arith.constant 0 : i32
    return %arg0, %c0_i32, %c0_i32_0 : i32, i32, i32
  }
  func.func @transform_1(%arg0: i32) -> (i32, i32) {
    %c0_i32 = arith.constant 0 : i32
    %c0_i32_0 = arith.constant 0 : i32
    %c0_i32_1 = arith.constant 0 : i32
    return %c0_i32, %c0_i32_0 : i32, i32
  }
  func.func @transform_2(%arg0: i32) -> (i32, i32) {
    %c0_i32 = arith.constant 0 : i32
    %c0_i32_0 = arith.constant 0 : i32
    %c0_i32_1 = arith.constant 0 : i32
    return %c0_i32, %c0_i32_0 : i32, i32
  }
  func.func @transform_3(%arg0: i32) -> (i32, i32) {
    %c0_i32 = arith.constant 0 : i32
    %c0_i32_0 = arith.constant 0 : i32
    %c0_i32_1 = arith.constant 0 : i32
    return %c0_i32, %c0_i32_0 : i32, i32
  }
  func.func @transform_4(%arg0: i32) -> (i32, i32, i32) {
    %c0_i32 = arith.constant 0 : i32
    %c0_i32_0 = arith.constant 0 : i32
    %c0_i32_1 = arith.constant 0 : i32
    return %arg0, %c0_i32, %c0_i32_0 : i32, i32, i32
  }
}

</mosaic_0001>

<llo_original>
// kernel: multi_head_attention.1
$region0: #{multi_head_attention.1}
  #allocation0 [shape = 'u32[]', space=smem, size = 0x4, offset = 0x4, fixed_abs, tag = 'smem constant byte address 0x4 - core index']
  #allocation1 [shape = 'u32[72,128]{1,0:T(1,128)}', space=vmem, size = 0x9000, scoped, tag = 'internal scratch']
  %s0 = inlined_call_operand.hbm [shape: f32[2,8,64], index: 0, kind: input, shape index: {}]
  %s1 = inlined_call_operand.hbm [shape: f32[64,192], index: 1, kind: input, shape index: {}]
  %s2 = inlined_call_operand.hbm [shape: f32[64,64], index: 2, kind: input, shape index: {}]
  %s3 = inlined_call_operand.vmem [shape: f32[1,64], index: 3, kind: input, shape index: {}]
  %s4 = inlined_call_operand.hbm [shape: f32[2,8,64], index: 4, kind: output, shape index: {}]
  %s5 = sld [smem:[#allocation0]]
  $region38: #{multi_head_attention.1} parent=0
    _
  %s7 = ssub.s32 1, %s5
  %s8 = scalar_select 0, %s7, %s5
  $region1: #{multi_head_attention.1} parent=0
    #allocation2 [shape = 'u8[8192]{0}', space=vmem, size = 0x2000, scoped, tag = 'input window, operand 0, single buffered']
    #allocation3 [shape = 's32[1]{0}', space=sflag, size = 0x4, scoped, tag = 'scoped memory for multi_head_attention.1']
    #allocation4 [shape = 's32[1]{0}', space=sflag, size = 0x4, scoped, tag = 'scoped memory for multi_head_attention.1']
    #allocation5 [shape = 'u8[65536]{0}', space=vmem, size = 0x10000, scoped, tag = 'input window, operand 1, single buffered']
    #allocation6 [shape = 's32[1]{0}', space=sflag, size = 0x4, scoped, tag = 'scoped memory for multi_head_attention.1']
    #allocation7 [shape = 'u8[32768]{0}', space=vmem, size = 0x8000, scoped, tag = 'input window, operand 2, single buffered']
    #allocation8 [shape = 'u8[8192]{0}', space=vmem, size = 0x2000, scoped, tag = 'output window, operand 0, single buffered']
    %9 = vsyncpa [#allocation3], 0
    %10 = vsyncpa [#allocation6], 0
    %11 = vsyncpa [#allocation4], 0
    // Predicated region
    $region2: #{multi_head_attention.1} parent=1 // pred_check
      _
    $region3: #{multi_head_attention.1} parent=1 // pred_check_branch
      %13 = sbr.rel (0) target = $region5
    $region4: #{multi_head_attention.1} parent=1 // pred_region
      %15 = vsyncadd [#allocation3], 0
      %s16 = sshll.u32 %s0, 4
      %s17 = int_to_ptr.hbm [resolvable:$true] %s16
      %s18 = sshll.u32 [#allocation2], 4
      %s19 = int_to_ptr.vmem [resolvable:$true] %s18
      %24 = dma.hbm_to_vmem [thread:$0]  %s17, 256, %s19, [#allocation3], 128, 128, 8
    $region5: #{multi_head_attention.1} parent=1 // pred_fallthru
      _
    // Predicated region
    $region6: #{multi_head_attention.1} parent=1 // pred_check
      _
    $region7: #{multi_head_attention.1} parent=1 // pred_check_branch
      %26 = sbr.rel (0) target = $region9
    $region8: #{multi_head_attention.1} parent=1 // pred_region
      %28 = vsyncadd [#allocation6], 0
      %s29 = sshll.u32 %s1, 4
      %s30 = int_to_ptr.hbm [resolvable:$true] %s29
      %s31 = sshll.u32 [#allocation5], 4
      %s32 = int_to_ptr.vmem [resolvable:$true] %s31
      %37 = dma.hbm_to_vmem [thread:$0]  %s30, 2048, %s32, [#allocation6], 256, 256, 16
    $region9: #{multi_head_attention.1} parent=1 // pred_fallthru
      _
    // Predicated region
    $region10: #{multi_head_attention.1} parent=1 // pred_check
      _
    $region11: #{multi_head_attention.1} parent=1 // pred_check_branch
      %39 = sbr.rel (0) target = $region13
    $region12: #{multi_head_attention.1} parent=1 // pred_region
      %41 = vsyncadd [#allocation6], 0
      %s42 = sshll.u32 %s2, 4
      %s43 = int_to_ptr.hbm [resolvable:$true] %s42
      %s44 = sshll.u32 [#allocation7], 4
      %s45 = int_to_ptr.vmem [resolvable:$true] %s44
      %50 = dma.hbm_to_vmem [thread:$0]  %s43, 1024, %s45, [#allocation6], 128, 128, 8
    $region13: #{multi_head_attention.1} parent=1 // pred_fallthru
      _
    // Predicated region
    $region14: #{multi_head_attention.1} parent=1 // pred_check
      _
    $region15: #{multi_head_attention.1} parent=1 // pred_check_branch
      %52 = sbr.rel (0) target = $region17
    $region16: #{multi_head_attention.1} parent=1 // pred_region
      _
    $region17: #{multi_head_attention.1} parent=1 // pred_fallthru
      _
    // Predicated region
    $region18: #{multi_head_attention.1} parent=1 // pred_check
      _
    $region19: #{multi_head_attention.1} parent=1 // pred_check_branch
      %54 = sbr.rel (0) target = $region21
    $region20: #{multi_head_attention.1} parent=1 // pred_region
      %56 = dma.done [#allocation3], 256
    $region21: #{multi_head_attention.1} parent=1 // pred_fallthru
      _
    // Predicated region
    $region22: #{multi_head_attention.1} parent=1 // pred_check
      _
    $region23: #{multi_head_attention.1} parent=1 // pred_check_branch
      %58 = sbr.rel (0) target = $region25
    $region24: #{multi_head_attention.1} parent=1 // pred_region
      %60 = dma.done [#allocation6], 2048
    $region25: #{multi_head_attention.1} parent=1 // pred_fallthru
      _
    // Predicated region
    $region26: #{multi_head_attention.1} parent=1 // pred_check
      _
    $region27: #{multi_head_attention.1} parent=1 // pred_check_branch
      %62 = sbr.rel (0) target = $region29
    $region28: #{multi_head_attention.1} parent=1 // pred_region
      %64 = dma.done [#allocation6], 1024
    $region29: #{multi_head_attention.1} parent=1 // pred_fallthru
      _
    %v65 = vld [vmem:[#allocation2] sm:$0xff]
    %v66 = vld [vmem:[#allocation2 + $0x8] sm:$0xff]
    %v67 = vld [vmem:[#allocation5] sm:$0xff]
    %v68 = vld [vmem:[#allocation5 + $0x8] sm:$0xff]
    %v69 = vld [vmem:[#allocation5 + $0x10] sm:$0xff]
    %v70 = vld [vmem:[#allocation5 + $0x18] sm:$0xff]
    %v71 = vld [vmem:[#allocation5 + $0x20] sm:$0xff]
    %v72 = vld [vmem:[#allocation5 + $0x28] sm:$0xff]
    %v73 = vld [vmem:[#allocation5 + $0x30] sm:$0xff]
    %v74 = vld [vmem:[#allocation5 + $0x38] sm:$0xff]
    %v75 = vld [vmem:[#allocation5 + $0x40] sm:$0xff]
    %v76 = vld [vmem:[#allocation5 + $0x48] sm:$0xff]
    %v77 = vld [vmem:[#allocation5 + $0x50] sm:$0xff]
    %v78 = vld [vmem:[#allocation5 + $0x58] sm:$0xff]
    %v79 = vld [vmem:[#allocation5 + $0x60] sm:$0xff]
    %v80 = vld [vmem:[#allocation5 + $0x68] sm:$0xff]
    %v81 = vld [vmem:[#allocation5 + $0x70] sm:$0xff]
    %v82 = vld [vmem:[#allocation5 + $0x78] sm:$0xff]
    %vm83 = vcmask 523264
    %v85 = vsel %vm83, %v65, 0
    %v88 = vsel %vm83, %v66, 0
    %90 = vmatpush.msra.mxu0 0.0
    %91 = vmatpush.msra.mxu0 0.0
    %92 = vmatpush.msra.mxu0 0.0
    %93 = vmatpush.msra.mxu0 0.0
    %94 = vmatpush.msra.mxu0 0.0
    %95 = vmatpush.msra.mxu0 0.0
    %96 = vmatpush.msra.mxu0 0.0
    %97 = vmatpush.msra.mxu0 0.0
    %98 = vmatpush.msra.mxu0 %v81
    %99 = vmatpush.msra.mxu0 %v79
    %100 = vmatpush.msra.mxu0 %v77
    %101 = vmatpush.msra.mxu0 %v75
    %102 = vmatpush.msra.mxu0 %v73
    %103 = vmatpush.msra.mxu0 %v71
    %104 = vmatpush.msra.mxu0 %v69
    %105 = vmatpush.msra.mxu0 %v67
    %106 = vmatmul.f32.gmra.mxu0 %v85
    %v107 = vpop.f32.mrf.mxu0
    %v108 = vadd.f32 0.0, %v107
    %109 = vmatmul.f32.gmra.mxu0 %v88
    %v110 = vpop.f32.mrf.mxu0
    %v111 = vadd.f32 0.0, %v110
    %112 = vdwg.mxu0
    %113 = vmatpush.msra.mxu0 0.0
    %114 = vmatpush.msra.mxu0 0.0
    %115 = vmatpush.msra.mxu0 0.0
    %116 = vmatpush.msra.mxu0 0.0
    %117 = vmatpush.msra.mxu0 0.0
    %118 = vmatpush.msra.mxu0 0.0
    %119 = vmatpush.msra.mxu0 0.0
    %120 = vmatpush.msra.mxu0 0.0
    %121 = vmatpush.msra.mxu0 %v82
    %122 = vmatpush.msra.mxu0 %v80
    %123 = vmatpush.msra.mxu0 %v78
    %124 = vmatpush.msra.mxu0 %v76
    %125 = vmatpush.msra.mxu0 %v74
    %126 = vmatpush.msra.mxu0 %v72
    %127 = vmatpush.msra.mxu0 %v70
    %128 = vmatpush.msra.mxu0 %v68
    %129 = vmatmul.f32.gmra.mxu0 %v85
    %v130 = vpop.f32.mrf.mxu0
    %v131 = vadd.f32 0.0, %v130
    %132 = vmatmul.f32.gmra.mxu0 %v88
    %v133 = vpop.f32.mrf.mxu0
    %v134 = vadd.f32 0.0, %v133
    %135 = vdwg.mxu0
    %v136 = vlaneseq
    %v137 = vshrl.u32 %v136, 7
    %v138 = vlaneseq
    %v139 = vand.u32 %v138, 127
    %vm140 = vcmp.ge.s32.totalorder %v137, %v139
    %v141 = vsel %vm140, 0.0, -1e+30
    %v142 = vmul.f32 %v108, 0.25
    %v143 = vmul.f32 %v111, 0.25
    %145 = vrot.lane.b32.xlu0 %v108, 64
    %v146 = vpop.permute.xlu0 %145
    %vm147 = vcmask 130048
    %v149 = vsel %vm147, %v142, 0
    %v151 = vsel %vm147, %v146, 0
    %153 = vmatpush.xpose.msra.mxu0 0.0
    %154 = vmatpush.xpose.msra.mxu0 0.0
    %155 = vmatpush.xpose.msra.mxu0 0.0
    %156 = vmatpush.xpose.msra.mxu0 0.0
    %157 = vmatpush.xpose.msra.mxu0 0.0
    %158 = vmatpush.xpose.msra.mxu0 0.0
    %159 = vmatpush.xpose.msra.mxu0 0.0
    %160 = vmatpush.xpose.msra.mxu0 0.0
    %161 = vmatpush.xpose.msra.mxu0 0.0
    %162 = vmatpush.xpose.msra.mxu0 0.0
    %163 = vmatpush.xpose.msra.mxu0 0.0
    %164 = vmatpush.xpose.msra.mxu0 0.0
    %165 = vmatpush.xpose.msra.mxu0 0.0
    %166 = vmatpush.xpose.msra.mxu0 0.0
    %167 = vmatpush.xpose.msra.mxu0 0.0
    %168 = vmatpush.xpose.msra.mxu0 %v151
    %169 = vmatmul.f32.gmra.mxu0 %v149
    %v170 = vpop.f32.mrf.mxu0
    %v171 = vadd.f32 %v141, %v170
    %172 = vdwg.mxu0
    %174 = vrot.lane.b32.xlu0 %v111, 64
    %v175 = vpop.permute.xlu0 %174
    %v177 = vsel %vm147, %v143, 0
    %v179 = vsel %vm147, %v175, 0
    %181 = vmatpush.xpose.msra.mxu0 0.0
    %182 = vmatpush.xpose.msra.mxu0 0.0
    %183 = vmatpush.xpose.msra.mxu0 0.0
    %184 = vmatpush.xpose.msra.mxu0 0.0
    %185 = vmatpush.xpose.msra.mxu0 0.0
    %186 = vmatpush.xpose.msra.mxu0 0.0
    %187 = vmatpush.xpose.msra.mxu0 0.0
    %188 = vmatpush.xpose.msra.mxu0 0.0
    %189 = vmatpush.xpose.msra.mxu0 0.0
    %190 = vmatpush.xpose.msra.mxu0 0.0
    %191 = vmatpush.xpose.msra.mxu0 0.0
    %192 = vmatpush.xpose.msra.mxu0 0.0
    %193 = vmatpush.xpose.msra.mxu0 0.0
    %194 = vmatpush.xpose.msra.mxu0 0.0
    %195 = vmatpush.xpose.msra.mxu0 0.0
    %196 = vmatpush.xpose.msra.mxu0 %v179
    %197 = vmatmul.f32.gmra.mxu0 %v177
    %v198 = vpop.f32.mrf.mxu0
    %v199 = vadd.f32 %v141, %v198
    %200 = vdwg.mxu0
    %vm201 = vcmask 64512
    %v202 = vsel %vm201, %v171, -inf
    %203 = vmax.xlane.f32.xlu0 %v202
    %v204 = vpop.xlane.xlu0 %203
    %v205 = vsel %vm201, %v199, -inf
    %206 = vmax.xlane.f32.xlu0 %v205
    %v207 = vpop.xlane.xlu0 %206
    %v208 = vsub.f32 %v171, %v204
    %v209 = vsub.f32 %v199, %v207
    %v210 = vmul.f32 %v208, 1.442695
    %v211 = vpow.pop %v210
    %v212 = vmul.f32 %v209, 1.442695
    %v213 = vpow.pop %v212
    %v214 = vsel %vm201, %v211, 0.0
    %215 = vadd.xlane.f32.xlu0 %v214
    %v216 = vpop.xlane.xlu0 %215
    %v217 = vsel %vm201, %v213, 0.0
    %218 = vadd.xlane.f32.xlu0 %v217
    %v219 = vpop.xlane.xlu0 %218
    %v221 = vsel %vm201, %v211, 0
    %223 = vmatpush.msra.mxu0 0.0
    %224 = vmatpush.msra.mxu0 0.0
    %225 = vmatpush.msra.mxu0 0.0
    %226 = vmatpush.msra.mxu0 0.0
    %227 = vmatpush.msra.mxu0 0.0
    %228 = vmatpush.msra.mxu0 0.0
    %229 = vmatpush.msra.mxu0 0.0
    %230 = vmatpush.msra.mxu0 0.0
    %231 = vmatpush.msra.mxu0 0.0
    %232 = vmatpush.msra.mxu0 0.0
    %233 = vmatpush.msra.mxu0 0.0
    %234 = vmatpush.msra.mxu0 0.0
    %235 = vmatpush.msra.mxu0 0.0
    %236 = vmatpush.msra.mxu0 0.0
    %237 = vmatpush.msra.mxu0 0.0
    %238 = vmatpush.msra.mxu0 %v131
    %239 = vmatmul.f32.gmra.mxu0 %v221
    %v240 = vpop.f32.mrf.mxu0
    %v241 = vadd.f32 0.0, %v240
    %242 = vdwg.mxu0
    %v244 = vsel %vm201, %v213, 0
    %246 = vmatpush.msra.mxu0 0.0
    %247 = vmatpush.msra.mxu0 0.0
    %248 = vmatpush.msra.mxu0 0.0
    %249 = vmatpush.msra.mxu0 0.0
    %250 = vmatpush.msra.mxu0 0.0
    %251 = vmatpush.msra.mxu0 0.0
    %252 = vmatpush.msra.mxu0 0.0
    %253 = vmatpush.msra.mxu0 0.0
    %254 = vmatpush.msra.mxu0 0.0
    %255 = vmatpush.msra.mxu0 0.0
    %256 = vmatpush.msra.mxu0 0.0
    %257 = vmatpush.msra.mxu0 0.0
    %258 = vmatpush.msra.mxu0 0.0
    %259 = vmatpush.msra.mxu0 0.0
    %260 = vmatpush.msra.mxu0 0.0
    %261 = vmatpush.msra.mxu0 %v134
    %262 = vmatmul.f32.gmra.mxu0 %v244
    %v263 = vpop.f32.mrf.mxu0
    %v264 = vadd.f32 0.0, %v263
    %265 = vdwg.mxu0
    %v266 = vrcp.pop %v216
    %v267 = vrcp.pop %v219
    %v268 = vmul.f32 %v241, %v266
    %v269 = vmul.f32 %v264, %v267
    %v270 = vld [vmem:[#allocation7] sm:$0xff]
    %v271 = vld [vmem:[#allocation7 + $0x8] sm:$0xff]
    %272 = vrot.lane.b32.xlu0 %v142, 112
    %v273 = vpop.permute.xlu0 %272
    %274 = vrot.lane.b32.xlu0 %v108, 48
    %v275 = vpop.permute.xlu0 %274
    %v276 = vsel %vm147, %v273, 0
    %v278 = vsel %vm147, %v275, 0
    %280 = vmatpush.xpose.msra.mxu0 0.0
    %281 = vmatpush.xpose.msra.mxu0 0.0
    %282 = vmatpush.xpose.msra.mxu0 0.0
    %283 = vmatpush.xpose.msra.mxu0 0.0
    %284 = vmatpush.xpose.msra.mxu0 0.0
    %285 = vmatpush.xpose.msra.mxu0 0.0
    %286 = vmatpush.xpose.msra.mxu0 0.0
    %287 = vmatpush.xpose.msra.mxu0 0.0
    %288 = vmatpush.xpose.msra.mxu0 0.0
    %289 = vmatpush.xpose.msra.mxu0 0.0
    %290 = vmatpush.xpose.msra.mxu0 0.0
    %291 = vmatpush.xpose.msra.mxu0 0.0
    %292 = vmatpush.xpose.msra.mxu0 0.0
    %293 = vmatpush.xpose.msra.mxu0 0.0
    %294 = vmatpush.xpose.msra.mxu0 0.0
    %295 = vmatpush.xpose.msra.mxu0 %v278
    %296 = vmatmul.f32.gmra.mxu0 %v276
    %v297 = vpop.f32.mrf.mxu0
    %v298 = vadd.f32 %v141, %v297
    %299 = vdwg.mxu0
    %300 = vrot.lane.b32.xlu0 %v143, 112
    %v301 = vpop.permute.xlu0 %300
    %302 = vrot.lane.b32.xlu0 %v111, 48
    %v303 = vpop.permute.xlu0 %302
    %v304 = vsel %vm147, %v301, 0
    %v306 = vsel %vm147, %v303, 0
    %308 = vmatpush.xpose.msra.mxu0 0.0
    %309 = vmatpush.xpose.msra.mxu0 0.0
    %310 = vmatpush.xpose.msra.mxu0 0.0
    %311 = vmatpush.xpose.msra.mxu0 0.0
    %312 = vmatpush.xpose.msra.mxu0 0.0
    %313 = vmatpush.xpose.msra.mxu0 0.0
    %314 = vmatpush.xpose.msra.mxu0 0.0
    %315 = vmatpush.xpose.msra.mxu0 0.0
    %316 = vmatpush.xpose.msra.mxu0 0.0
    %317 = vmatpush.xpose.msra.mxu0 0.0
    %318 = vmatpush.xpose.msra.mxu0 0.0
    %319 = vmatpush.xpose.msra.mxu0 0.0
    %320 = vmatpush.xpose.msra.mxu0 0.0
    %321 = vmatpush.xpose.msra.mxu0 0.0
    %322 = vmatpush.xpose.msra.mxu0 0.0
    %323 = vmatpush.xpose.msra.mxu0 %v306
    %324 = vmatmul.f32.gmra.mxu0 %v304
    %v325 = vpop.f32.mrf.mxu0
    %v326 = vadd.f32 %v141, %v325
    %327 = vdwg.mxu0
    %v328 = vsel %vm201, %v298, -inf
    %329 = vmax.xlane.f32.xlu0 %v328
    %v330 = vpop.xlane.xlu0 %329
    %v331 = vsel %vm201, %v326, -inf
    %332 = vmax.xlane.f32.xlu0 %v331
    %v333 = vpop.xlane.xlu0 %332
    %v334 = vsub.f32 %v298, %v330
    %v335 = vsub.f32 %v326, %v333
    %v336 = vmul.f32 %v334, 1.442695
    %v337 = vpow.pop %v336
    %v338 = vmul.f32 %v335, 1.442695
    %v339 = vpow.pop %v338
    %v340 = vsel %vm201, %v337, 0.0
    %341 = vadd.xlane.f32.xlu0 %v340
    %v342 = vpop.xlane.xlu0 %341
    %v343 = vsel %vm201, %v339, 0.0
    %344 = vadd.xlane.f32.xlu0 %v343
    %v345 = vpop.xlane.xlu0 %344
    %347 = vrot.lane.b32.xlu0 %v131, 112
    %v348 = vpop.permute.xlu0 %347
    %v351 = vsel %vm201, %v337, 0
    %353 = vmatpush.msra.mxu0 0.0
    %354 = vmatpush.msra.mxu0 0.0
    %355 = vmatpush.msra.mxu0 0.0
    %356 = vmatpush.msra.mxu0 0.0
    %357 = vmatpush.msra.mxu0 0.0
    %358 = vmatpush.msra.mxu0 0.0
    %359 = vmatpush.msra.mxu0 0.0
    %360 = vmatpush.msra.mxu0 0.0
    %361 = vmatpush.msra.mxu0 0.0
    %362 = vmatpush.msra.mxu0 0.0
    %363 = vmatpush.msra.mxu0 0.0
    %364 = vmatpush.msra.mxu0 0.0
    %365 = vmatpush.msra.mxu0 0.0
    %366 = vmatpush.msra.mxu0 0.0
    %367 = vmatpush.msra.mxu0 0.0
    %368 = vmatpush.msra.mxu0 %v348
    %369 = vmatmul.f32.gmra.mxu0 %v351
    %v370 = vpop.f32.mrf.mxu0
    %v371 = vadd.f32 0.0, %v370
    %372 = vdwg.mxu0
    %374 = vrot.lane.b32.xlu0 %v134, 112
    %v375 = vpop.permute.xlu0 %374
    %v378 = vsel %vm201, %v339, 0
    %380 = vmatpush.msra.mxu0 0.0
    %381 = vmatpush.msra.mxu0 0.0
    %382 = vmatpush.msra.mxu0 0.0
    %383 = vmatpush.msra.mxu0 0.0
    %384 = vmatpush.msra.mxu0 0.0
    %385 = vmatpush.msra.mxu0 0.0
    %386 = vmatpush.msra.mxu0 0.0
    %387 = vmatpush.msra.mxu0 0.0
    %388 = vmatpush.msra.mxu0 0.0
    %389 = vmatpush.msra.mxu0 0.0
    %390 = vmatpush.msra.mxu0 0.0
    %391 = vmatpush.msra.mxu0 0.0
    %392 = vmatpush.msra.mxu0 0.0
    %393 = vmatpush.msra.mxu0 0.0
    %394 = vmatpush.msra.mxu0 0.0
    %395 = vmatpush.msra.mxu0 %v375
    %396 = vmatmul.f32.gmra.mxu0 %v378
    %v397 = vpop.f32.mrf.mxu0
    %v398 = vadd.f32 0.0, %v397
    %399 = vdwg.mxu0
    %v400 = vrcp.pop %v342
    %v401 = vrcp.pop %v345
    %v402 = vmul.f32 %v371, %v400
    %v403 = vmul.f32 %v398, %v401
    %v404 = vld [vmem:[#allocation7 + $0x10] sm:$0xff]
    %v405 = vld [vmem:[#allocation7 + $0x18] sm:$0xff]
    %v407 = vsel %vm147, %v402, 0
    %v410 = vsel %vm147, %v403, 0
    %412 = vmatpush.msra.mxu0 0.0
    %413 = vmatpush.msra.mxu0 0.0
    %414 = vmatpush.msra.mxu0 0.0
    %415 = vmatpush.msra.mxu0 0.0
    %416 = vmatpush.msra.mxu0 0.0
    %417 = vmatpush.msra.mxu0 0.0
    %418 = vmatpush.msra.mxu0 0.0
    %419 = vmatpush.msra.mxu0 0.0
    %420 = vmatpush.msra.mxu0 0.0
    %421 = vmatpush.msra.mxu0 0.0
    %422 = vmatpush.msra.mxu0 0.0
    %423 = vmatpush.msra.mxu0 0.0
    %424 = vmatpush.msra.mxu0 0.0
    %425 = vmatpush.msra.mxu0 0.0
    %426 = vmatpush.msra.mxu0 %v405
    %427 = vmatpush.msra.mxu0 %v404
    %428 = vmatmul.f32.gmra.mxu0 %v407
    %v429 = vpop.f32.mrf.mxu0
    %v430 = vadd.f32 0.0, %v429
    %431 = vmatmul.f32.gmra.mxu0 %v410
    %v432 = vpop.f32.mrf.mxu0
    %v433 = vadd.f32 0.0, %v432
    %434 = vdwg.mxu0
    %v436 = vsel %vm147, %v268, 0
    %v439 = vsel %vm147, %v269, 0
    %441 = vmatpush.msra.mxu0 0.0
    %442 = vmatpush.msra.mxu0 0.0
    %443 = vmatpush.msra.mxu0 0.0
    %444 = vmatpush.msra.mxu0 0.0
    %445 = vmatpush.msra.mxu0 0.0
    %446 = vmatpush.msra.mxu0 0.0
    %447 = vmatpush.msra.mxu0 0.0
    %448 = vmatpush.msra.mxu0 0.0
    %449 = vmatpush.msra.mxu0 0.0
    %450 = vmatpush.msra.mxu0 0.0
    %451 = vmatpush.msra.mxu0 0.0
    %452 = vmatpush.msra.mxu0 0.0
    %453 = vmatpush.msra.mxu0 0.0
    %454 = vmatpush.msra.mxu0 0.0
    %455 = vmatpush.msra.mxu0 %v271
    %456 = vmatpush.msra.mxu0 %v270
    %457 = vmatmul.f32.gmra.mxu0 %v436
    %v458 = vpop.f32.mrf.mxu0
    %v459 = vadd.f32 %v430, %v458
    %460 = vmatmul.f32.gmra.mxu0 %v439
    %v461 = vpop.f32.mrf.mxu0
    %v462 = vadd.f32 %v433, %v461
    %463 = vdwg.mxu0
    %464 = vrot.lane.b32.xlu0 %v142, 96
    %v465 = vpop.permute.xlu0 %464
    %466 = vrot.lane.b32.xlu0 %v108, 32
    %v467 = vpop.permute.xlu0 %466
    %v468 = vsel %vm147, %v465, 0
    %v470 = vsel %vm147, %v467, 0
    %472 = vmatpush.xpose.msra.mxu0 0.0
    %473 = vmatpush.xpose.msra.mxu0 0.0
    %474 = vmatpush.xpose.msra.mxu0 0.0
    %475 = vmatpush.xpose.msra.mxu0 0.0
    %476 = vmatpush.xpose.msra.mxu0 0.0
    %477 = vmatpush.xpose.msra.mxu0 0.0
    %478 = vmatpush.xpose.msra.mxu0 0.0
    %479 = vmatpush.xpose.msra.mxu0 0.0
    %480 = vmatpush.xpose.msra.mxu0 0.0
    %481 = vmatpush.xpose.msra.mxu0 0.0
    %482 = vmatpush.xpose.msra.mxu0 0.0
    %483 = vmatpush.xpose.msra.mxu0 0.0
    %484 = vmatpush.xpose.msra.mxu0 0.0
    %485 = vmatpush.xpose.msra.mxu0 0.0
    %486 = vmatpush.xpose.msra.mxu0 0.0
    %487 = vmatpush.xpose.msra.mxu0 %v470
    %488 = vmatmul.f32.gmra.mxu0 %v468
    %v489 = vpop.f32.mrf.mxu0
    %v490 = vadd.f32 %v141, %v489
    %491 = vdwg.mxu0
    %492 = vrot.lane.b32.xlu0 %v143, 96
    %v493 = vpop.permute.xlu0 %492
    %494 = vrot.lane.b32.xlu0 %v111, 32
    %v495 = vpop.permute.xlu0 %494
    %v496 = vsel %vm147, %v493, 0
    %v498 = vsel %vm147, %v495, 0
    %500 = vmatpush.xpose.msra.mxu0 0.0
    %501 = vmatpush.xpose.msra.mxu0 0.0
    %502 = vmatpush.xpose.msra.mxu0 0.0
    %503 = vmatpush.xpose.msra.mxu0 0.0
    %504 = vmatpush.xpose.msra.mxu0 0.0
    %505 = vmatpush.xpose.msra.mxu0 0.0
    %506 = vmatpush.xpose.msra.mxu0 0.0
    %507 = vmatpush.xpose.msra.mxu0 0.0
    %508 = vmatpush.xpose.msra.mxu0 0.0
    %509 = vmatpush.xpose.msra.mxu0 0.0
    %510 = vmatpush.xpose.msra.mxu0 0.0
    %511 = vmatpush.xpose.msra.mxu0 0.0
    %512 = vmatpush.xpose.msra.mxu0 0.0
    %513 = vmatpush.xpose.msra.mxu0 0.0
    %514 = vmatpush.xpose.msra.mxu0 0.0
    %515 = vmatpush.xpose.msra.mxu0 %v498
    %516 = vmatmul.f32.gmra.mxu0 %v496
    %v517 = vpop.f32.mrf.mxu0
    %v518 = vadd.f32 %v141, %v517
    %519 = vdwg.mxu0
    %v520 = vsel %vm201, %v490, -inf
    %521 = vmax.xlane.f32.xlu0 %v520
    %v522 = vpop.xlane.xlu0 %521
    %v523 = vsel %vm201, %v518, -inf
    %524 = vmax.xlane.f32.xlu0 %v523
    %v525 = vpop.xlane.xlu0 %524
    %v526 = vsub.f32 %v490, %v522
    %v527 = vsub.f32 %v518, %v525
    %v528 = vmul.f32 %v526, 1.442695
    %v529 = vpow.pop %v528
    %v530 = vmul.f32 %v527, 1.442695
    %v531 = vpow.pop %v530
    %v532 = vsel %vm201, %v529, 0.0
    %533 = vadd.xlane.f32.xlu0 %v532
    %v534 = vpop.xlane.xlu0 %533
    %v535 = vsel %vm201, %v531, 0.0
    %536 = vadd.xlane.f32.xlu0 %v535
    %v537 = vpop.xlane.xlu0 %536
    %538 = vrot.lane.b32.xlu0 %v131, 96
    %v539 = vpop.permute.xlu0 %538
    %v542 = vsel %vm201, %v529, 0
    %544 = vmatpush.msra.mxu0 0.0
    %545 = vmatpush.msra.mxu0 0.0
    %546 = vmatpush.msra.mxu0 0.0
    %547 = vmatpush.msra.mxu0 0.0
    %548 = vmatpush.msra.mxu0 0.0
    %549 = vmatpush.msra.mxu0 0.0
    %550 = vmatpush.msra.mxu0 0.0
    %551 = vmatpush.msra.mxu0 0.0
    %552 = vmatpush.msra.mxu0 0.0
    %553 = vmatpush.msra.mxu0 0.0
    %554 = vmatpush.msra.mxu0 0.0
    %555 = vmatpush.msra.mxu0 0.0
    %556 = vmatpush.msra.mxu0 0.0
    %557 = vmatpush.msra.mxu0 0.0
    %558 = vmatpush.msra.mxu0 0.0
    %559 = vmatpush.msra.mxu0 %v539
    %560 = vmatmul.f32.gmra.mxu0 %v542
    %v561 = vpop.f32.mrf.mxu0
    %v562 = vadd.f32 0.0, %v561
    %563 = vdwg.mxu0
    %564 = vrot.lane.b32.xlu0 %v134, 96
    %v565 = vpop.permute.xlu0 %564
    %v568 = vsel %vm201, %v531, 0
    %570 = vmatpush.msra.mxu0 0.0
    %571 = vmatpush.msra.mxu0 0.0
    %572 = vmatpush.msra.mxu0 0.0
    %573 = vmatpush.msra.mxu0 0.0
    %574 = vmatpush.msra.mxu0 0.0
    %575 = vmatpush.msra.mxu0 0.0
    %576 = vmatpush.msra.mxu0 0.0
    %577 = vmatpush.msra.mxu0 0.0
    %578 = vmatpush.msra.mxu0 0.0
    %579 = vmatpush.msra.mxu0 0.0
    %580 = vmatpush.msra.mxu0 0.0
    %581 = vmatpush.msra.mxu0 0.0
    %582 = vmatpush.msra.mxu0 0.0
    %583 = vmatpush.msra.mxu0 0.0
    %584 = vmatpush.msra.mxu0 0.0
    %585 = vmatpush.msra.mxu0 %v565
    %586 = vmatmul.f32.gmra.mxu0 %v568
    %v587 = vpop.f32.mrf.mxu0
    %v588 = vadd.f32 0.0, %v587
    %589 = vdwg.mxu0
    %v590 = vrcp.pop %v534
    %v591 = vrcp.pop %v537
    %v592 = vmul.f32 %v562, %v590
    %v593 = vmul.f32 %v588, %v591
    %v594 = vld [vmem:[#allocation7 + $0x20] sm:$0xff]
    %v595 = vld [vmem:[#allocation7 + $0x28] sm:$0xff]
    %v597 = vsel %vm147, %v592, 0
    %v600 = vsel %vm147, %v593, 0
    %602 = vmatpush.msra.mxu0 0.0
    %603 = vmatpush.msra.mxu0 0.0
    %604 = vmatpush.msra.mxu0 0.0
    %605 = vmatpush.msra.mxu0 0.0
    %606 = vmatpush.msra.mxu0 0.0
    %607 = vmatpush.msra.mxu0 0.0
    %608 = vmatpush.msra.mxu0 0.0
    %609 = vmatpush.msra.mxu0 0.0
    %610 = vmatpush.msra.mxu0 0.0
    %611 = vmatpush.msra.mxu0 0.0
    %612 = vmatpush.msra.mxu0 0.0
    %613 = vmatpush.msra.mxu0 0.0
    %614 = vmatpush.msra.mxu0 0.0
    %615 = vmatpush.msra.mxu0 0.0
    %616 = vmatpush.msra.mxu0 %v595
    %617 = vmatpush.msra.mxu0 %v594
    %618 = vmatmul.f32.gmra.mxu0 %v597
    %v619 = vpop.f32.mrf.mxu0
    %v620 = vadd.f32 0.0, %v619
    %621 = vmatmul.f32.gmra.mxu0 %v600
    %v622 = vpop.f32.mrf.mxu0
    %v623 = vadd.f32 0.0, %v622
    %624 = vdwg.mxu0
    %v625 = vadd.f32 %v459, %v620
    %v626 = vadd.f32 %v462, %v623
    %627 = vrot.lane.b32.xlu0 %v142, 80
    %v628 = vpop.permute.xlu0 %627
    %629 = vrot.lane.b32.xlu0 %v108, 16
    %v630 = vpop.permute.xlu0 %629
    %v631 = vsel %vm147, %v628, 0
    %v633 = vsel %vm147, %v630, 0
    %635 = vmatpush.xpose.msra.mxu0 0.0
    %636 = vmatpush.xpose.msra.mxu0 0.0
    %637 = vmatpush.xpose.msra.mxu0 0.0
    %638 = vmatpush.xpose.msra.mxu0 0.0
    %639 = vmatpush.xpose.msra.mxu0 0.0
    %640 = vmatpush.xpose.msra.mxu0 0.0
    %641 = vmatpush.xpose.msra.mxu0 0.0
    %642 = vmatpush.xpose.msra.mxu0 0.0
    %643 = vmatpush.xpose.msra.mxu0 0.0
    %644 = vmatpush.xpose.msra.mxu0 0.0
    %645 = vmatpush.xpose.msra.mxu0 0.0
    %646 = vmatpush.xpose.msra.mxu0 0.0
    %647 = vmatpush.xpose.msra.mxu0 0.0
    %648 = vmatpush.xpose.msra.mxu0 0.0
    %649 = vmatpush.xpose.msra.mxu0 0.0
    %650 = vmatpush.xpose.msra.mxu0 %v633
    %651 = vmatmul.f32.gmra.mxu0 %v631
    %v652 = vpop.f32.mrf.mxu0
    %v653 = vadd.f32 %v141, %v652
    %654 = vdwg.mxu0
    %655 = vrot.lane.b32.xlu0 %v143, 80
    %v656 = vpop.permute.xlu0 %655
    %657 = vrot.lane.b32.xlu0 %v111, 16
    %v658 = vpop.permute.xlu0 %657
    %v659 = vsel %vm147, %v656, 0
    %v661 = vsel %vm147, %v658, 0
    %663 = vmatpush.xpose.msra.mxu0 0.0
    %664 = vmatpush.xpose.msra.mxu0 0.0
    %665 = vmatpush.xpose.msra.mxu0 0.0
    %666 = vmatpush.xpose.msra.mxu0 0.0
    %667 = vmatpush.xpose.msra.mxu0 0.0
    %668 = vmatpush.xpose.msra.mxu0 0.0
    %669 = vmatpush.xpose.msra.mxu0 0.0
    %670 = vmatpush.xpose.msra.mxu0 0.0
    %671 = vmatpush.xpose.msra.mxu0 0.0
    %672 = vmatpush.xpose.msra.mxu0 0.0
    %673 = vmatpush.xpose.msra.mxu0 0.0
    %674 = vmatpush.xpose.msra.mxu0 0.0
    %675 = vmatpush.xpose.msra.mxu0 0.0
    %676 = vmatpush.xpose.msra.mxu0 0.0
    %677 = vmatpush.xpose.msra.mxu0 0.0
    %678 = vmatpush.xpose.msra.mxu0 %v661
    %679 = vmatmul.f32.gmra.mxu0 %v659
    %v680 = vpop.f32.mrf.mxu0
    %v681 = vadd.f32 %v141, %v680
    %682 = vdwg.mxu0
    %v683 = vsel %vm201, %v653, -inf
    %684 = vmax.xlane.f32.xlu0 %v683
    %v685 = vpop.xlane.xlu0 %684
    %v686 = vsel %vm201, %v681, -inf
    %687 = vmax.xlane.f32.xlu0 %v686
    %v688 = vpop.xlane.xlu0 %687
    %v689 = vsub.f32 %v653, %v685
    %v690 = vsub.f32 %v681, %v688
    %v691 = vmul.f32 %v689, 1.442695
    %v692 = vpow.pop %v691
    %v693 = vmul.f32 %v690, 1.442695
    %v694 = vpow.pop %v693
    %v695 = vsel %vm201, %v692, 0.0
    %696 = vadd.xlane.f32.xlu0 %v695
    %v697 = vpop.xlane.xlu0 %696
    %v698 = vsel %vm201, %v694, 0.0
    %699 = vadd.xlane.f32.xlu0 %v698
    %v700 = vpop.xlane.xlu0 %699
    %701 = vrot.lane.b32.xlu0 %v131, 80
    %v702 = vpop.permute.xlu0 %701
    %v705 = vsel %vm201, %v692, 0
    %707 = vmatpush.msra.mxu0 0.0
    %708 = vmatpush.msra.mxu0 0.0
    %709 = vmatpush.msra.mxu0 0.0
    %710 = vmatpush.msra.mxu0 0.0
    %711 = vmatpush.msra.mxu0 0.0
    %712 = vmatpush.msra.mxu0 0.0
    %713 = vmatpush.msra.mxu0 0.0
    %714 = vmatpush.msra.mxu0 0.0
    %715 = vmatpush.msra.mxu0 0.0
    %716 = vmatpush.msra.mxu0 0.0
    %717 = vmatpush.msra.mxu0 0.0
    %718 = vmatpush.msra.mxu0 0.0
    %719 = vmatpush.msra.mxu0 0.0
    %720 = vmatpush.msra.mxu0 0.0
    %721 = vmatpush.msra.mxu0 0.0
    %722 = vmatpush.msra.mxu0 %v702
    %723 = vmatmul.f32.gmra.mxu0 %v705
    %v724 = vpop.f32.mrf.mxu0
    %v725 = vadd.f32 0.0, %v724
    %726 = vdwg.mxu0
    %727 = vrot.lane.b32.xlu0 %v134, 80
    %v728 = vpop.permute.xlu0 %727
    %v731 = vsel %vm201, %v694, 0
    %733 = vmatpush.msra.mxu0 0.0
    %734 = vmatpush.msra.mxu0 0.0
    %735 = vmatpush.msra.mxu0 0.0
    %736 = vmatpush.msra.mxu0 0.0
    %737 = vmatpush.msra.mxu0 0.0
    %738 = vmatpush.msra.mxu0 0.0
    %739 = vmatpush.msra.mxu0 0.0
    %740 = vmatpush.msra.mxu0 0.0
    %741 = vmatpush.msra.mxu0 0.0
    %742 = vmatpush.msra.mxu0 0.0
    %743 = vmatpush.msra.mxu0 0.0
    %744 = vmatpush.msra.mxu0 0.0
    %745 = vmatpush.msra.mxu0 0.0
    %746 = vmatpush.msra.mxu0 0.0
    %747 = vmatpush.msra.mxu0 0.0
    %748 = vmatpush.msra.mxu0 %v728
    %749 = vmatmul.f32.gmra.mxu0 %v731
    %v750 = vpop.f32.mrf.mxu0
    %v751 = vadd.f32 0.0, %v750
    %752 = vdwg.mxu0
    %v753 = vrcp.pop %v697
    %v754 = vrcp.pop %v700
    %v755 = vmul.f32 %v725, %v753
    %v756 = vmul.f32 %v751, %v754
    %v757 = vld [vmem:[#allocation7 + $0x30] sm:$0xff]
    %v758 = vld [vmem:[#allocation7 + $0x38] sm:$0xff]
    %v760 = vsel %vm147, %v755, 0
    %v763 = vsel %vm147, %v756, 0
    %765 = vmatpush.msra.mxu0 0.0
    %766 = vmatpush.msra.mxu0 0.0
    %767 = vmatpush.msra.mxu0 0.0
    %768 = vmatpush.msra.mxu0 0.0
    %769 = vmatpush.msra.mxu0 0.0
    %770 = vmatpush.msra.mxu0 0.0
    %771 = vmatpush.msra.mxu0 0.0
    %772 = vmatpush.msra.mxu0 0.0
    %773 = vmatpush.msra.mxu0 0.0
    %774 = vmatpush.msra.mxu0 0.0
    %775 = vmatpush.msra.mxu0 0.0
    %776 = vmatpush.msra.mxu0 0.0
    %777 = vmatpush.msra.mxu0 0.0
    %778 = vmatpush.msra.mxu0 0.0
    %779 = vmatpush.msra.mxu0 %v758
    %780 = vmatpush.msra.mxu0 %v757
    %781 = vmatmul.f32.gmra.mxu0 %v760
    %v782 = vpop.f32.mrf.mxu0
    %v783 = vadd.f32 0.0, %v782
    %784 = vmatmul.f32.gmra.mxu0 %v763
    %v785 = vpop.f32.mrf.mxu0
    %v786 = vadd.f32 0.0, %v785
    %787 = vdwg.mxu0
    %v788 = vadd.f32 %v625, %v783
    %v789 = vadd.f32 %v626, %v786
    %v790 = vld [vmem:[%s3] sm:$0x1]
    %v792 = vperm.slane %v790, 0
    %v794 = vadd.f32 %v788, %v792
    %v795 = vadd.f32 %v789, %v792
    %796 = vst.msk [vmem:[#allocation8] sm:$0xff] %vm83, %v794
    %797 = vst.msk [vmem:[#allocation8 + $0x8] sm:$0xff] %vm83, %v795
    // Predicated region
    $region30: #{multi_head_attention.1} parent=1 // pred_check
      _
    $region31: #{multi_head_attention.1} parent=1 // pred_check_branch
      %799 = sbr.rel (0) target = $region33
    $region32: #{multi_head_attention.1} parent=1 // pred_region
      %801 = vsyncadd [#allocation4], 0
      %s802 = sshll.u32 [#allocation8], 4
      %s803 = int_to_ptr.vmem [resolvable:$true] %s802
      %s804 = sshll.u32 %s4, 4
      %s805 = int_to_ptr.hbm [resolvable:$true] %s804
      %810 = dma.vmem_to_hbm [thread:$0]  %s803, 256, %s805, [#allocation4], 128, 128, 8
    $region33: #{multi_head_attention.1} parent=1 // pred_fallthru
      _
    // Predicated region
    $region34: #{multi_head_attention.1} parent=1 // pred_check
      _
    $region35: #{multi_head_attention.1} parent=1 // pred_check_branch
      %812 = sbr.rel (0) target = $region37
    $region36: #{multi_head_attention.1} parent=1 // pred_region
      %814 = dma.done [#allocation4], 256
    $region37: #{multi_head_attention.1} parent=1 // pred_fallthru
      _
    %815 = vsyncpa [#allocation3], 1
    %816 = vsyncpa [#allocation6], 1
    %817 = vsyncpa [#allocation4], 1

</llo_original>
